<compile_context>
chip_gen: v6e
topology: v6e:2x2x1
jax: 0.10.0
libtpu: 0.0.40
codegen_flags: <defaults>
</compile_context>

<pallas_src>
import jax
import jax.numpy as jnp
from jax.experimental import pallas as pl
from jax.experimental.pallas import tpu as pltpu

HIDDEN = 240
LANE = 128
SUBLANE = 8
MAX_TILE = 512   # large-batch row tile; sweep 512/1024 per chip if desired


def _round_up(n, m):
    return (n + m - 1) // m * m


def _pad2d(a, rows, cols):
    r, c = a.shape
    if (r, c) == (rows, cols):
        return a
    return jnp.pad(a, ((0, rows - r), (0, cols - c)))


def generator_kernel(x_ref,
                     w1_ref, b1_ref,
                     w2_ref, b2_ref,
                     w3_ref, b3_ref,
                     w4_ref, b4_ref,
                     o_ref):
    """Fused 4-layer MLP: (Linear -> ReLU) x 3 -> Linear -> Sigmoid, one tile.

    Weights may be f32 or bf16 (wdt); MXU accumulation is always f32 via
    preferred_element_type.  Dropout layers are identity (eval mode).
    """
    wdt = w1_ref.dtype

    h = x_ref[...].astype(wdt)
    h = jnp.dot(h, w1_ref[...], preferred_element_type=jnp.float32) + b1_ref[...]
    h = jnp.maximum(h, 0.0)   # ReLU (dropout = identity in eval mode)

    h = jnp.dot(h.astype(wdt), w2_ref[...],
                preferred_element_type=jnp.float32) + b2_ref[...]
    h = jnp.maximum(h, 0.0)

    h = jnp.dot(h.astype(wdt), w3_ref[...],
                preferred_element_type=jnp.float32) + b3_ref[...]
    h = jnp.maximum(h, 0.0)

    h = jnp.dot(h.astype(wdt), w4_ref[...],
                preferred_element_type=jnp.float32) + b4_ref[...]

    # Plain sigmoid is safe in f32 (exp overflow -> inf -> 1/inf -> 0).  The
    # exp and the reciprocal both run on the EUP (use approx=True if ~1e-3
    # relative error is acceptable).
    o_ref[...] = pl.reciprocal(1.0 + jnp.exp(-h), approx=False)


def prepare_params(params, weight_dtype=jnp.float32):
    """Pad feature dims to lane multiples and cast weights ONCE (hoisted out of
    the per-call path).  Weights are (in, out) (transposed vs PyTorch); biases
    are (1, out).  bf16 weights are recommended on v6e/v7x (MXU is bf16-native,
    accumulation stays f32).  Returns (prepared_dict, pose_dim)."""
    noise_dim = params["w1"].shape[0]
    pose_dim = params["w4"].shape[1]
    h_pad = _round_up(HIDDEN, LANE)     # 240 -> 256
    p_pad = _round_up(pose_dim, LANE)   # lane-dense output stores

    prep = {
        # w1 keeps its true (unpadded) noise_dim rows: x is not padded in K.
        "w1": _pad2d(params["w1"], noise_dim, h_pad).astype(weight_dtype),
        "b1": _pad2d(params["b1"], 1, h_pad).astype(jnp.float32),
        "w2": _pad2d(params["w2"], h_pad, h_pad).astype(weight_dtype),
        "b2": _pad2d(params["b2"], 1, h_pad).astype(jnp.float32),
        "w3": _pad2d(params["w3"], h_pad, h_pad).astype(weight_dtype),
        "b3": _pad2d(params["b3"], 1, h_pad).astype(jnp.float32),
        "w4": _pad2d(params["w4"], h_pad, p_pad).astype(weight_dtype),
        "b4": _pad2d(params["b4"], 1, p_pad).astype(jnp.float32),
    }
    return prep, pose_dim


def _pick_block_b(b_pad, block_b):
    if block_b is not None:
        bb = _round_up(block_b, SUBLANE)
    elif b_pad <= 4 * SUBLANE:
        bb = b_pad                                        # tiny batch: 1 step
    elif b_pad <= 2 * MAX_TILE:
        # mid-size: >=2 grid steps so both v7x TensorCores get a share.
        bb = _round_up(pl.cdiv(b_pad, 2), SUBLANE)
    else:
        bb = MAX_TILE                                     # large batch: 512-row tiles
    return min(bb, b_pad)


def generator_forward(x, prepared, pose_dim, *, block_b=None):
    """x: (B, noise_dim) f32.  prepared: output of prepare_params()."""
    B, noise_dim = x.shape
    h_pad = prepared["w1"].shape[1]
    p_pad = prepared["w4"].shape[1]

    # Batch padded only to a sublane multiple (<=7 extra rows).  The grid's
    # last tile may be ragged; Pallas pads the read and masks the store.
    b_pad = _round_up(B, SUBLANE)
    xp = x.astype(jnp.float32)
    if b_pad != B:
        xp = jnp.pad(xp, ((0, b_pad - B), (0, 0)))

    bb = _pick_block_b(b_pad, block_b)
    grid = (pl.cdiv(b_pad, bb),)

    # Weights/biases are grid-invariant (same block every step).
    full = lambda shape: pl.BlockSpec(shape, lambda i: (0, 0))

    out = pl.pallas_call(
        generator_kernel,
        out_shape=jax.ShapeDtypeStruct((b_pad, p_pad), jnp.float32),
        grid_spec=pltpu.PrefetchScalarGridSpec(
            num_scalar_prefetch=0,
            grid=grid,
            in_specs=[
                # x block: last dim equals the full array dim (no lane pad of K).
                pl.BlockSpec((bb, noise_dim), lambda i: (i, 0)),
                full((noise_dim, h_pad)), full((1, h_pad)),   # layer 1
                full((h_pad, h_pad)),     full((1, h_pad)),   # layer 2
                full((h_pad, h_pad)),     full((1, h_pad)),   # layer 3
                full((h_pad, p_pad)),     full((1, p_pad)),   # layer 4
            ],
            out_specs=pl.BlockSpec((bb, p_pad), lambda i: (i, 0)),
        ),
        compiler_params=pltpu.CompilerParams(
            dimension_semantics=("parallel",)),   # megacore-shard the batch axis
    )(xp, prepared["w1"], prepared["b1"], prepared["w2"], prepared["b2"],
      prepared["w3"], prepared["b3"], prepared["w4"], prepared["b4"])

    # Column slice drops the lane padding of the pose dim (kept lane-dense for
    # unmasked stores inside the kernel); row slice only when B % 8 != 0.
    return out[:B, :pose_dim]


def init_params(key, noise_dim, pose_dim):
    """Deterministic synthetic weights (PyTorch-style uniform fan-in init)."""
    ks = jax.random.split(key, 8)
    dims = [(noise_dim, HIDDEN), (HIDDEN, HIDDEN), (HIDDEN, HIDDEN), (HIDDEN, pose_dim)]
    params = {}
    for idx, (fan_in, fan_out) in enumerate(dims, start=1):
        bound = 1.0 / jnp.sqrt(fan_in)
        params[f"w{idx}"] = jax.random.uniform(
            ks[2 * (idx - 1)], (fan_in, fan_out), jnp.float32, -bound, bound)
        params[f"b{idx}"] = jax.random.uniform(
            ks[2 * (idx - 1) + 1], (1, fan_out), jnp.float32, -bound, bound)
    return params


def generator_reference(x, params):
    hp = jax.lax.Precision.HIGHEST
    h = jnp.maximum(jnp.dot(x, params["w1"], precision=hp) + params["b1"], 0.0)
    h = jnp.maximum(jnp.dot(h, params["w2"], precision=hp) + params["b2"], 0.0)
    h = jnp.maximum(jnp.dot(h, params["w3"], precision=hp) + params["b3"], 0.0)
    return jax.nn.sigmoid(jnp.dot(h, params["w4"], precision=hp) + params["b4"])


if __name__ == "__main__":
    key = jax.random.PRNGKey(0)
    k_param, k_x, k_x2 = jax.random.split(key, 3)

    noise_dim, pose_dim = 32, 48
    params = init_params(k_param, noise_dim, pose_dim)

    # Pad/cast the weights once, outside the per-call path.
    prep_f32, pdim = prepare_params(params, jnp.float32)

    # Small batch: single grid step.
    batch = 16
    x = jax.random.normal(k_x, (batch, noise_dim), jnp.float32)
    out = jax.block_until_ready(generator_forward(x, prep_f32, pdim))
    ref = generator_reference(x, params)
    assert out.shape == (batch, pose_dim)
    assert jnp.allclose(out, ref, atol=1e-5, rtol=1e-5), "f32 mismatch vs reference"

    # Mid-size batch: 2-step grid (both v7x TensorCores busy) with a ragged
    # last tile (200 rows, 104-row tiles) -- exercises Pallas boundary masking.
    x2 = jax.random.normal(k_x2, (200, noise_dim), jnp.float32)
    out2 = jax.block_until_ready(generator_forward(x2, prep_f32, pdim))
    ref2 = generator_reference(x2, params)
    assert out2.shape == (200, pose_dim)
    assert jnp.allclose(out2, ref2, atol=1e-5, rtol=1e-5), "ragged-tile mismatch"

    # bf16-weight fast path (recommended on v6e/v7x), f32 MXU accumulation.
    prep_bf16, _ = prepare_params(params, jnp.bfloat16)
    out_bf16 = jax.block_until_ready(generator_forward(x, prep_bf16, pdim))
    assert jnp.allclose(out_bf16, ref, atol=5e-2, rtol=5e-2), "bf16 mismatch"

    print("KERNEL_OK")
</pallas_src>

<mosaic_0001>
module attributes {stable_mosaic.version = 11 : i64} {
  func.func @generator_kernel(%arg0: i32, %arg1: memref<16x32xf32, #tpu.memory_space<vmem>>, %arg2: memref<32x256xf32, #tpu.memory_space<vmem>>, %arg3: memref<1x256xf32, #tpu.memory_space<vmem>>, %arg4: memref<256x256xf32, #tpu.memory_space<vmem>>, %arg5: memref<1x256xf32, #tpu.memory_space<vmem>>, %arg6: memref<256x256xf32, #tpu.memory_space<vmem>>, %arg7: memref<1x256xf32, #tpu.memory_space<vmem>>, %arg8: memref<256x128xf32, #tpu.memory_space<vmem>>, %arg9: memref<1x128xf32, #tpu.memory_space<vmem>>, %arg10: memref<16x128xf32, #tpu.memory_space<vmem>>) attributes {dimension_semantics = [#tpu.dimension_semantics<parallel>], iteration_bounds = array<i64: 1>, scalar_prefetch = 0 : i64, scratch_operands = 0 : i64, tpu.core_type = #tpu.core_type<tc>, window_params = [{transform_indices = @transform_0, window_bounds = array<i64: 16, 32>}, {pipeline_mode = #tpu.pipeline_mode<synchronous>, transform_indices = @transform_1, window_bounds = array<i64: 32, 256>}, {pipeline_mode = #tpu.pipeline_mode<synchronous>, transform_indices = @transform_2, window_bounds = array<i64: 1, 256>}, {pipeline_mode = #tpu.pipeline_mode<synchronous>, transform_indices = @transform_3, window_bounds = array<i64: 256, 256>}, {pipeline_mode = #tpu.pipeline_mode<synchronous>, transform_indices = @transform_4, window_bounds = array<i64: 1, 256>}, {pipeline_mode = #tpu.pipeline_mode<synchronous>, transform_indices = @transform_5, window_bounds = array<i64: 256, 256>}, {pipeline_mode = #tpu.pipeline_mode<synchronous>, transform_indices = @transform_6, window_bounds = array<i64: 1, 256>}, {pipeline_mode = #tpu.pipeline_mode<synchronous>, transform_indices = @transform_7, window_bounds = array<i64: 256, 128>}, {pipeline_mode = #tpu.pipeline_mode<synchronous>, transform_indices = @transform_8, window_bounds = array<i64: 1, 128>}, {transform_indices = @transform_9, window_bounds = array<i64: 16, 128>}]} {
    %c0 = arith.constant 0 : index
    %c0_0 = arith.constant 0 : index
    %0 = vector.load %arg1[%c0, %c0_0] : memref<16x32xf32, #tpu.memory_space<vmem>>, vector<16x32xf32>
    %c0_1 = arith.constant 0 : index
    %c0_2 = arith.constant 0 : index
    %1 = vector.load %arg2[%c0_1, %c0_2] : memref<32x256xf32, #tpu.memory_space<vmem>>, vector<32x256xf32>
    %cst = arith.constant dense<0.000000e+00> : vector<16x256xf32>
    %2 = tpu.matmul %0, %1, %cst {dimension_numbers = #tpu.dot_dimension_numbers<[1], [0], [0], [1], [0, 0, 1, 1], [], []>} : vector<16x32xf32>, vector<32x256xf32>, vector<16x256xf32> -> vector<16x256xf32>
    %c0_3 = arith.constant 0 : index
    %c0_4 = arith.constant 0 : index
    %3 = vector.load %arg3[%c0_3, %c0_4] : memref<1x256xf32, #tpu.memory_space<vmem>>, vector<1x256xf32>
    %4 = vector.broadcast %3 : vector<1x256xf32> to vector<16x256xf32>
    %5 = arith.addf %2, %4 : vector<16x256xf32>
    %cst_5 = arith.constant 0.000000e+00 : f32
    %6 = vector.broadcast %cst_5 : f32 to vector<16x256xf32>
    %7 = arith.maximumf %5, %6 : vector<16x256xf32>
    %c0_6 = arith.constant 0 : index
    %c0_7 = arith.constant 0 : index
    %8 = vector.load %arg4[%c0_6, %c0_7] : memref<256x256xf32, #tpu.memory_space<vmem>>, vector<256x256xf32>
    %cst_8 = arith.constant dense<0.000000e+00> : vector<16x256xf32>
    %9 = tpu.matmul %7, %8, %cst_8 {dimension_numbers = #tpu.dot_dimension_numbers<[1], [0], [0], [1], [0, 0, 1, 1], [], []>} : vector<16x256xf32>, vector<256x256xf32>, vector<16x256xf32> -> vector<16x256xf32>
    %c0_9 = arith.constant 0 : index
    %c0_10 = arith.constant 0 : index
    %10 = vector.load %arg5[%c0_9, %c0_10] : memref<1x256xf32, #tpu.memory_space<vmem>>, vector<1x256xf32>
    %11 = vector.broadcast %10 : vector<1x256xf32> to vector<16x256xf32>
    %12 = arith.addf %9, %11 : vector<16x256xf32>
    %cst_11 = arith.constant 0.000000e+00 : f32
    %13 = vector.broadcast %cst_11 : f32 to vector<16x256xf32>
    %14 = arith.maximumf %12, %13 : vector<16x256xf32>
    %c0_12 = arith.constant 0 : index
    %c0_13 = arith.constant 0 : index
    %15 = vector.load %arg6[%c0_12, %c0_13] : memref<256x256xf32, #tpu.memory_space<vmem>>, vector<256x256xf32>
    %cst_14 = arith.constant dense<0.000000e+00> : vector<16x256xf32>
    %16 = tpu.matmul %14, %15, %cst_14 {dimension_numbers = #tpu.dot_dimension_numbers<[1], [0], [0], [1], [0, 0, 1, 1], [], []>} : vector<16x256xf32>, vector<256x256xf32>, vector<16x256xf32> -> vector<16x256xf32>
    %c0_15 = arith.constant 0 : index
    %c0_16 = arith.constant 0 : index
    %17 = vector.load %arg7[%c0_15, %c0_16] : memref<1x256xf32, #tpu.memory_space<vmem>>, vector<1x256xf32>
    %18 = vector.broadcast %17 : vector<1x256xf32> to vector<16x256xf32>
    %19 = arith.addf %16, %18 : vector<16x256xf32>
    %cst_17 = arith.constant 0.000000e+00 : f32
    %20 = vector.broadcast %cst_17 : f32 to vector<16x256xf32>
    %21 = arith.maximumf %19, %20 : vector<16x256xf32>
    %c0_18 = arith.constant 0 : index
    %c0_19 = arith.constant 0 : index
    %22 = vector.load %arg8[%c0_18, %c0_19] : memref<256x128xf32, #tpu.memory_space<vmem>>, vector<256x128xf32>
    %cst_20 = arith.constant dense<0.000000e+00> : vector<16x128xf32>
    %23 = tpu.matmul %21, %22, %cst_20 {dimension_numbers = #tpu.dot_dimension_numbers<[1], [0], [0], [1], [0, 0, 1, 1], [], []>} : vector<16x256xf32>, vector<256x128xf32>, vector<16x128xf32> -> vector<16x128xf32>
    %c0_21 = arith.constant 0 : index
    %c0_22 = arith.constant 0 : index
    %24 = vector.load %arg9[%c0_21, %c0_22] : memref<1x128xf32, #tpu.memory_space<vmem>>, vector<1x128xf32>
    %25 = vector.broadcast %24 : vector<1x128xf32> to vector<16x128xf32>
    %26 = arith.addf %23, %25 : vector<16x128xf32>
    %cst_23 = arith.constant 0.000000e+00 : f32
    %27 = vector.broadcast %cst_23 : f32 to vector<16x128xf32>
    %28 = arith.subf %27, %26 : vector<16x128xf32>
    %29 = math.exp %28 : vector<16x128xf32>
    %cst_24 = arith.constant 1.000000e+00 : f32
    %30 = vector.broadcast %cst_24 : f32 to vector<16x128xf32>
    %31 = arith.addf %30, %29 : vector<16x128xf32>
    %32 = tpu.reciprocal %31 : vector<16x128xf32> -> vector<16x128xf32>
    %c0_25 = arith.constant 0 : index
    %c0_26 = arith.constant 0 : index
    %33 = vector.load %arg10[%c0_25, %c0_26] : memref<16x128xf32, #tpu.memory_space<vmem>>, vector<16x128xf32>
    tpu.vector_store %arg10[%c0_25, %c0_26], %32 {strides = array<i32>} : memref<16x128xf32, #tpu.memory_space<vmem>>, vector<16x128xf32>,
    return
  }
  func.func @transform_0(%arg0: i32) -> (i32, i32) {
    %c0_i32 = arith.constant 0 : i32
    %c0_i32_0 = arith.constant 0 : i32
    return %arg0, %c0_i32 : i32, i32
  }
  func.func @transform_1(%arg0: i32) -> (i32, i32) {
    %c0_i32 = arith.constant 0 : i32
    %c0_i32_0 = arith.constant 0 : i32
    %c0_i32_1 = arith.constant 0 : i32
    return %c0_i32, %c0_i32_0 : i32, i32
  }
  func.func @transform_2(%arg0: i32) -> (i32, i32) {
    %c0_i32 = arith.constant 0 : i32
    %c0_i32_0 = arith.constant 0 : i32
    %c0_i32_1 = arith.constant 0 : i32
    return %c0_i32, %c0_i32_0 : i32, i32
  }
  func.func @transform_3(%arg0: i32) -> (i32, i32) {
    %c0_i32 = arith.constant 0 : i32
    %c0_i32_0 = arith.constant 0 : i32
    %c0_i32_1 = arith.constant 0 : i32
    return %c0_i32, %c0_i32_0 : i32, i32
  }
  func.func @transform_4(%arg0: i32) -> (i32, i32) {
    %c0_i32 = arith.constant 0 : i32
    %c0_i32_0 = arith.constant 0 : i32
    %c0_i32_1 = arith.constant 0 : i32
    return %c0_i32, %c0_i32_0 : i32, i32
  }
  func.func @transform_5(%arg0: i32) -> (i32, i32) {
    %c0_i32 = arith.constant 0 : i32
    %c0_i32_0 = arith.constant 0 : i32
    %c0_i32_1 = arith.constant 0 : i32
    return %c0_i32, %c0_i32_0 : i32, i32
  }
  func.func @transform_6(%arg0: i32) -> (i32, i32) {
    %c0_i32 = arith.constant 0 : i32
    %c0_i32_0 = arith.constant 0 : i32
    %c0_i32_1 = arith.constant 0 : i32
    return %c0_i32, %c0_i32_0 : i32, i32
  }
  func.func @transform_7(%arg0: i32) -> (i32, i32) {
    %c0_i32 = arith.constant 0 : i32
    %c0_i32_0 = arith.constant 0 : i32
    %c0_i32_1 = arith.constant 0 : i32
    return %c0_i32, %c0_i32_0 : i32, i32
  }
  func.func @transform_8(%arg0: i32) -> (i32, i32) {
    %c0_i32 = arith.constant 0 : i32
    %c0_i32_0 = arith.constant 0 : i32
    %c0_i32_1 = arith.constant 0 : i32
    return %c0_i32, %c0_i32_0 : i32, i32
  }
  func.func @transform_9(%arg0: i32) -> (i32, i32) {
    %c0_i32 = arith.constant 0 : i32
    %c0_i32_0 = arith.constant 0 : i32
    return %arg0, %c0_i32 : i32, i32
  }
}

</mosaic_0001>

<llo_original>
// kernel: tpu_custom_call.1
$region0: #{tpu_custom_call.1}
  #allocation0 [shape = 'u32[]', space=smem, size = 0x4, offset = 0x4, fixed_abs, tag = 'smem constant byte address 0x4 - core index']
  #allocation1 [shape = 'u32[144,128]{1,0:T(1,128)}', space=vmem, size = 0x12000, scoped, tag = 'internal scratch']
  %s0 = inlined_call_operand.hbm [shape: f32[16,32], index: 0, kind: input, shape index: {}]
  %s1 = inlined_call_operand.hbm [shape: f32[32,256], index: 1, kind: input, shape index: {}]
  %s2 = inlined_call_operand.vmem [shape: f32[1,256], index: 2, kind: input, shape index: {}]
  %s3 = inlined_call_operand.hbm [shape: f32[256,256], index: 3, kind: input, shape index: {}]
  %s4 = inlined_call_operand.vmem [shape: f32[1,256], index: 4, kind: input, shape index: {}]
  %s5 = inlined_call_operand.hbm [shape: f32[256,256], index: 5, kind: input, shape index: {}]
  %s6 = inlined_call_operand.vmem [shape: f32[1,256], index: 6, kind: input, shape index: {}]
  %s7 = inlined_call_operand.hbm [shape: f32[256,128], index: 7, kind: input, shape index: {}]
  %s8 = inlined_call_operand.vmem [shape: f32[1,128], index: 8, kind: input, shape index: {}]
  %s9 = inlined_call_operand.hbm [shape: f32[16,128], index: 9, kind: output, shape index: {}]
  %s10 = sld [smem:[#allocation0]]
  $region66: #{tpu_custom_call.1} parent=0
    _
  %s12 = ssub.s32 1, %s10
  %s13 = scalar_select 0, %s12, %s10
  $region1: #{tpu_custom_call.1} parent=0
    #allocation2 [shape = 'u8[8192]{0}', space=vmem, size = 0x2000, scoped, tag = 'input window, operand 0, single buffered']
    #allocation3 [shape = 's32[1]{0}', space=sflag, size = 0x4, scoped, tag = 'scoped memory for tpu_custom_call.1']
    #allocation4 [shape = 's32[1]{0}', space=sflag, size = 0x4, scoped, tag = 'scoped memory for tpu_custom_call.1']
    #allocation5 [shape = 'u8[32768]{0}', space=vmem, size = 0x8000, scoped, tag = 'input window, operand 1, single buffered']
    #allocation6 [shape = 's32[1]{0}', space=sflag, size = 0x4, scoped, tag = 'scoped memory for tpu_custom_call.1']
    #allocation7 [shape = 'u8[262144]{0}', space=vmem, size = 0x40000, scoped, tag = 'input window, operand 3, single buffered']
    #allocation8 [shape = 'u8[262144]{0}', space=vmem, size = 0x40000, scoped, tag = 'input window, operand 5, single buffered']
    #allocation9 [shape = 's32[1]{0}', space=sflag, size = 0x4, scoped, tag = 'scoped memory for tpu_custom_call.1']
    #allocation10 [shape = 'u8[131072]{0}', space=vmem, size = 0x20000, scoped, tag = 'input window, operand 7, single buffered']
    #allocation11 [shape = 'u8[8192]{0}', space=vmem, size = 0x2000, scoped, tag = 'output window, operand 0, single buffered']
    %14 = vsyncpa [#allocation3], 0
    %15 = vsyncpa [#allocation6], 0
    %16 = vsyncpa [#allocation9], 0
    %17 = vsyncpa [#allocation4], 0
    // Predicated region
    $region2: #{tpu_custom_call.1} parent=1 // pred_check
      _
    $region3: #{tpu_custom_call.1} parent=1 // pred_check_branch
      %19 = sbr.rel (0) target = $region5
    $region4: #{tpu_custom_call.1} parent=1 // pred_region
      %s21 = ssub.s32 256, 256
      %22 = vsyncadd [#allocation3], %s21
      %s23 = sshll.u32 [#allocation2], 4
      %s24 = int_to_ptr.vmem [resolvable:$true] %s23
      %29 = dma.hbm_to_vmem [thread:$0]  %s0, 256, %s24, [#allocation3], 128, 128, 8
    $region5: #{tpu_custom_call.1} parent=1 // pred_fallthru
      _
    // Predicated region
    $region6: #{tpu_custom_call.1} parent=1 // pred_check
      _
    $region7: #{tpu_custom_call.1} parent=1 // pred_check_branch
      %31 = sbr.rel (0) target = $region9
    $region8: #{tpu_custom_call.1} parent=1 // pred_region
      %s33 = ssub.s32 1024, 1024
      %34 = vsyncadd [#allocation6], %s33
      %s35 = sshll.u32 [#allocation5], 4
      %s36 = int_to_ptr.vmem [resolvable:$true] %s35
      %41 = dma.hbm_to_vmem [thread:$0]  %s1, 1024, %s36, [#allocation6], 256, 256, 16
    $region9: #{tpu_custom_call.1} parent=1 // pred_fallthru
      _
    // Predicated region
    $region10: #{tpu_custom_call.1} parent=1 // pred_check
      _
    $region11: #{tpu_custom_call.1} parent=1 // pred_check_branch
      %43 = sbr.rel (0) target = $region13
    $region12: #{tpu_custom_call.1} parent=1 // pred_region
      _
    $region13: #{tpu_custom_call.1} parent=1 // pred_fallthru
      _
    // Predicated region
    $region14: #{tpu_custom_call.1} parent=1 // pred_check
      _
    $region15: #{tpu_custom_call.1} parent=1 // pred_check_branch
      %45 = sbr.rel (0) target = $region17
    $region16: #{tpu_custom_call.1} parent=1 // pred_region
      %s47 = ssub.s32 8192, 8192
      %48 = vsyncadd [#allocation6], %s47
      %s49 = sshll.u32 [#allocation7], 4
      %s50 = int_to_ptr.vmem [resolvable:$true] %s49
      %55 = dma.hbm_to_vmem [thread:$0]  %s3, 8192, %s50, [#allocation6], 256, 256, 16
    $region17: #{tpu_custom_call.1} parent=1 // pred_fallthru
      _
    // Predicated region
    $region18: #{tpu_custom_call.1} parent=1 // pred_check
      _
    $region19: #{tpu_custom_call.1} parent=1 // pred_check_branch
      %57 = sbr.rel (0) target = $region21
    $region20: #{tpu_custom_call.1} parent=1 // pred_region
      _
    $region21: #{tpu_custom_call.1} parent=1 // pred_fallthru
      _
    // Predicated region
    $region22: #{tpu_custom_call.1} parent=1 // pred_check
      _
    $region23: #{tpu_custom_call.1} parent=1 // pred_check_branch
      %59 = sbr.rel (0) target = $region25
    $region24: #{tpu_custom_call.1} parent=1 // pred_region
      %s61 = ssub.s32 8192, 8192
      %62 = vsyncadd [#allocation9], %s61
      %s63 = sshll.u32 [#allocation8], 4
      %s64 = int_to_ptr.vmem [resolvable:$true] %s63
      %69 = dma.hbm_to_vmem [thread:$0]  %s5, 8192, %s64, [#allocation9], 256, 256, 16
    $region25: #{tpu_custom_call.1} parent=1 // pred_fallthru
      _
    // Predicated region
    $region26: #{tpu_custom_call.1} parent=1 // pred_check
      _
    $region27: #{tpu_custom_call.1} parent=1 // pred_check_branch
      %71 = sbr.rel (0) target = $region29
    $region28: #{tpu_custom_call.1} parent=1 // pred_region
      _
    $region29: #{tpu_custom_call.1} parent=1 // pred_fallthru
      _
    // Predicated region
    $region30: #{tpu_custom_call.1} parent=1 // pred_check
      _
    $region31: #{tpu_custom_call.1} parent=1 // pred_check_branch
      %73 = sbr.rel (0) target = $region33
    $region32: #{tpu_custom_call.1} parent=1 // pred_region
      %s75 = ssub.s32 4096, 4096
      %76 = vsyncadd [#allocation9], %s75
      %s77 = sshll.u32 [#allocation10], 4
      %s78 = int_to_ptr.vmem [resolvable:$true] %s77
      %83 = dma.hbm_to_vmem [thread:$0]  %s7, 4096, %s78, [#allocation9], 128, 128, 8
    $region33: #{tpu_custom_call.1} parent=1 // pred_fallthru
      _
    // Predicated region
    $region34: #{tpu_custom_call.1} parent=1 // pred_check
      _
    $region35: #{tpu_custom_call.1} parent=1 // pred_check_branch
      %85 = sbr.rel (0) target = $region37
    $region36: #{tpu_custom_call.1} parent=1 // pred_region
      _
    $region37: #{tpu_custom_call.1} parent=1 // pred_fallthru
      _
    // Predicated region
    $region38: #{tpu_custom_call.1} parent=1 // pred_check
      _
    $region39: #{tpu_custom_call.1} parent=1 // pred_check_branch
      %87 = sbr.rel (0) target = $region41
    $region40: #{tpu_custom_call.1} parent=1 // pred_region
      %88 = dma.done [#allocation3], 256
    $region41: #{tpu_custom_call.1} parent=1 // pred_fallthru
      _
    // Predicated region
    $region42: #{tpu_custom_call.1} parent=1 // pred_check
      _
    $region43: #{tpu_custom_call.1} parent=1 // pred_check_branch
      %90 = sbr.rel (0) target = $region45
    $region44: #{tpu_custom_call.1} parent=1 // pred_region
      %91 = dma.done [#allocation6], 1024
    $region45: #{tpu_custom_call.1} parent=1 // pred_fallthru
      _
    // Predicated region
    $region46: #{tpu_custom_call.1} parent=1 // pred_check
      _
    $region47: #{tpu_custom_call.1} parent=1 // pred_check_branch
      %93 = sbr.rel (0) target = $region49
    $region48: #{tpu_custom_call.1} parent=1 // pred_region
      %94 = dma.done [#allocation6], 8192
    $region49: #{tpu_custom_call.1} parent=1 // pred_fallthru
      _
    // Predicated region
    $region50: #{tpu_custom_call.1} parent=1 // pred_check
      _
    $region51: #{tpu_custom_call.1} parent=1 // pred_check_branch
      %96 = sbr.rel (0) target = $region53
    $region52: #{tpu_custom_call.1} parent=1 // pred_region
      %97 = dma.done [#allocation9], 8192
    $region53: #{tpu_custom_call.1} parent=1 // pred_fallthru
      _
    // Predicated region
    $region54: #{tpu_custom_call.1} parent=1 // pred_check
      _
    $region55: #{tpu_custom_call.1} parent=1 // pred_check_branch
      %99 = sbr.rel (0) target = $region57
    $region56: #{tpu_custom_call.1} parent=1 // pred_region
      %100 = dma.done [#allocation9], 4096
    $region57: #{tpu_custom_call.1} parent=1 // pred_fallthru
      _
    %v101 = vld [vmem:[#allocation2] sm:$0xff]
    %v102 = vld [vmem:[#allocation2 + $0x8] sm:$0xff]
    %v103 = vld [vmem:[#allocation5] sm:$0xff]
    %v104 = vld [vmem:[#allocation5 + $0x8] sm:$0xff]
    %v105 = vld [vmem:[#allocation5 + $0x10] sm:$0xff]
    %v106 = vld [vmem:[#allocation5 + $0x18] sm:$0xff]
    %v107 = vld [vmem:[#allocation5 + $0x20] sm:$0xff]
    %v108 = vld [vmem:[#allocation5 + $0x28] sm:$0xff]
    %v109 = vld [vmem:[#allocation5 + $0x30] sm:$0xff]
    %v110 = vld [vmem:[#allocation5 + $0x38] sm:$0xff]
    %v111 = vld [vmem:[%s2] sm:$0x3]
    %v113 = vlaneseq
    %v114 = vshrl.u32 %v113, 7
    %v115 = vsub.s32 0, %v114
    %v116 = vrot.slane %v111, %v115
    %v117 = vlaneseq
    %v118 = vshrl.u32 %v117, 7
    %v119 = vsub.s32 1, %v118
    %v120 = vrot.slane %v111, %v119
    %vm123 = vcmask 261120
    %v125 = vsel %vm123, %v101, 0
    %v128 = vsel %vm123, %v102, 0
    %130 = vmatprep.subr.mxu0 0.0
    %131 = vmatpush1.msra.mxu0 0.0
    %132 = vmatprep.subr.mxu0 0.0
    %133 = vmatpush1.msra.mxu0 0.0
    %134 = vmatprep.subr.mxu0 0.0
    %135 = vmatpush1.msra.mxu0 0.0
    %136 = vmatprep.subr.mxu0 0.0
    %137 = vmatpush1.msra.mxu0 0.0
    %138 = vmatprep.subr.mxu0 0.0
    %139 = vmatpush1.msra.mxu0 0.0
    %140 = vmatprep.subr.mxu0 0.0
    %141 = vmatpush1.msra.mxu0 0.0
    %142 = vmatprep.subr.mxu0 0.0
    %143 = vmatpush1.msra.mxu0 0.0
    %144 = vmatprep.subr.mxu0 0.0
    %145 = vmatpush1.msra.mxu0 0.0
    %146 = vmatprep.subr.mxu0 0.0
    %147 = vmatpush1.msra.mxu0 0.0
    %148 = vmatprep.subr.mxu0 0.0
    %149 = vmatpush1.msra.mxu0 0.0
    %150 = vmatprep.subr.mxu0 0.0
    %151 = vmatpush1.msra.mxu0 0.0
    %152 = vmatprep.subr.mxu0 0.0
    %153 = vmatpush1.msra.mxu0 0.0
    %154 = vmatprep.subr.mxu0 %v110
    %155 = vmatpush1.msra.mxu0 %v109
    %156 = vmatprep.subr.mxu0 %v108
    %157 = vmatpush1.msra.mxu0 %v107
    %158 = vmatprep.subr.mxu0 %v106
    %159 = vmatpush1.msra.mxu0 %v105
    %160 = vmatprep.subr.mxu0 %v104
    %161 = vmatpush1.msra.mxu0 %v103
    %162 = vmatprep.subr.mxu0 0.0
    %163 = vmatpush2.msra.mxu0 0.0
    %164 = vmatprep.subr.mxu0 0.0
    %165 = vmatpush2.msra.mxu0 0.0
    %166 = vmatprep.subr.mxu0 0.0
    %167 = vmatpush2.msra.mxu0 0.0
    %168 = vmatprep.subr.mxu0 0.0
    %169 = vmatpush2.msra.mxu0 0.0
    %170 = vmatprep.subr.mxu0 0.0
    %171 = vmatpush2.msra.mxu0 0.0
    %172 = vmatprep.subr.mxu0 0.0
    %173 = vmatpush2.msra.mxu0 0.0
    %174 = vmatprep.subr.mxu0 0.0
    %175 = vmatpush2.msra.mxu0 0.0
    %176 = vmatprep.subr.mxu0 0.0
    %177 = vmatpush2.msra.mxu0 0.0
    %178 = vmatprep.subr.mxu0 0.0
    %179 = vmatpush2.msra.mxu0 0.0
    %180 = vmatprep.subr.mxu0 0.0
    %181 = vmatpush2.msra.mxu0 0.0
    %182 = vmatprep.subr.mxu0 0.0
    %183 = vmatpush2.msra.mxu0 0.0
    %184 = vmatprep.subr.mxu0 0.0
    %185 = vmatpush2.msra.mxu0 0.0
    %186 = vmatprep.subr.mxu0 0.0
    %187 = vmatpush2.msra.mxu0 0.0
    %188 = vmatprep.subr.mxu0 0.0
    %189 = vmatpush2.msra.mxu0 0.0
    %190 = vmatprep.subr.mxu0 0.0
    %191 = vmatpush2.msra.mxu0 0.0
    %192 = vmatprep.subr.mxu0 0.0
    %193 = vmatpush2.msra.mxu0 0.0
    %194 = vmatprep.mubr.f32.mxu0 0.0
    %195 = vmatmul.mubr.f32.gmra.mxu0 %v125
    %v196 = vpop.f32.mrf.mxu0
    %v197 = vadd.f32 %v116, %v196
    %v198 = vpop.f32.mrf.mxu0
    %v199 = vadd.f32 %v120, %v198
    %200 = vmatprep.mubr.f32.mxu0 0.0
    %201 = vmatmul.mubr.f32.gmra.mxu0 %v128
    %v202 = vpop.f32.mrf.mxu0
    %v203 = vadd.f32 %v116, %v202
    %v204 = vpop.f32.mrf.mxu0
    %v205 = vadd.f32 %v120, %v204
    %206 = vdwg.mxu0
    %v207 = vmax.f32 %v197, 0.0
    %v208 = vmax.f32 %v199, 0.0
    %v209 = vmax.f32 %v203, 0.0
    %v210 = vmax.f32 %v205, 0.0
    %v211 = vld [vmem:[#allocation7] sm:$0xff]
    %v212 = vld [vmem:[#allocation7 + $0x8] sm:$0xff]
    %v213 = vld [vmem:[#allocation7 + $0x10] sm:$0xff]
    %v214 = vld [vmem:[#allocation7 + $0x18] sm:$0xff]
    %v215 = vld [vmem:[#allocation7 + $0x20] sm:$0xff]
    %v216 = vld [vmem:[#allocation7 + $0x28] sm:$0xff]
    %v217 = vld [vmem:[#allocation7 + $0x30] sm:$0xff]
    %v218 = vld [vmem:[#allocation7 + $0x38] sm:$0xff]
    %v219 = vld [vmem:[#allocation7 + $0x40] sm:$0xff]
    %v220 = vld [vmem:[#allocation7 + $0x48] sm:$0xff]
    %v221 = vld [vmem:[#allocation7 + $0x50] sm:$0xff]
    %v222 = vld [vmem:[#allocation7 + $0x58] sm:$0xff]
    %v223 = vld [vmem:[#allocation7 + $0x60] sm:$0xff]
    %v224 = vld [vmem:[#allocation7 + $0x68] sm:$0xff]
    %v225 = vld [vmem:[#allocation7 + $0x70] sm:$0xff]
    %v226 = vld [vmem:[#allocation7 + $0x78] sm:$0xff]
    %v227 = vld [vmem:[#allocation7 + $0x80] sm:$0xff]
    %v228 = vld [vmem:[#allocation7 + $0x88] sm:$0xff]
    %v229 = vld [vmem:[#allocation7 + $0x90] sm:$0xff]
    %v230 = vld [vmem:[#allocation7 + $0x98] sm:$0xff]
    %v231 = vld [vmem:[#allocation7 + $0xa0] sm:$0xff]
    %v232 = vld [vmem:[#allocation7 + $0xa8] sm:$0xff]
    %v233 = vld [vmem:[#allocation7 + $0xb0] sm:$0xff]
    %v234 = vld [vmem:[#allocation7 + $0xb8] sm:$0xff]
    %v235 = vld [vmem:[#allocation7 + $0xc0] sm:$0xff]
    %v236 = vld [vmem:[#allocation7 + $0xc8] sm:$0xff]
    %v237 = vld [vmem:[#allocation7 + $0xd0] sm:$0xff]
    %v238 = vld [vmem:[#allocation7 + $0xd8] sm:$0xff]
    %v239 = vld [vmem:[#allocation7 + $0xe0] sm:$0xff]
    %v240 = vld [vmem:[#allocation7 + $0xe8] sm:$0xff]
    %v241 = vld [vmem:[#allocation7 + $0xf0] sm:$0xff]
    %v242 = vld [vmem:[#allocation7 + $0xf8] sm:$0xff]
    %v243 = vld [vmem:[#allocation7 + $0x100] sm:$0xff]
    %v244 = vld [vmem:[#allocation7 + $0x108] sm:$0xff]
    %v245 = vld [vmem:[#allocation7 + $0x110] sm:$0xff]
    %v246 = vld [vmem:[#allocation7 + $0x118] sm:$0xff]
    %v247 = vld [vmem:[#allocation7 + $0x120] sm:$0xff]
    %v248 = vld [vmem:[#allocation7 + $0x128] sm:$0xff]
    %v249 = vld [vmem:[#allocation7 + $0x130] sm:$0xff]
    %v250 = vld [vmem:[#allocation7 + $0x138] sm:$0xff]
    %v251 = vld [vmem:[#allocation7 + $0x140] sm:$0xff]
    %v252 = vld [vmem:[#allocation7 + $0x148] sm:$0xff]
    %v253 = vld [vmem:[#allocation7 + $0x150] sm:$0xff]
    %v254 = vld [vmem:[#allocation7 + $0x158] sm:$0xff]
    %v255 = vld [vmem:[#allocation7 + $0x160] sm:$0xff]
    %v256 = vld [vmem:[#allocation7 + $0x168] sm:$0xff]
    %v257 = vld [vmem:[#allocation7 + $0x170] sm:$0xff]
    %v258 = vld [vmem:[#allocation7 + $0x178] sm:$0xff]
    %v259 = vld [vmem:[#allocation7 + $0x180] sm:$0xff]
    %v260 = vld [vmem:[#allocation7 + $0x188] sm:$0xff]
    %v261 = vld [vmem:[#allocation7 + $0x190] sm:$0xff]
    %v262 = vld [vmem:[#allocation7 + $0x198] sm:$0xff]
    %v263 = vld [vmem:[#allocation7 + $0x1a0] sm:$0xff]
    %v264 = vld [vmem:[#allocation7 + $0x1a8] sm:$0xff]
    %v265 = vld [vmem:[#allocation7 + $0x1b0] sm:$0xff]
    %v266 = vld [vmem:[#allocation7 + $0x1b8] sm:$0xff]
    %v267 = vld [vmem:[#allocation7 + $0x1c0] sm:$0xff]
    %v268 = vld [vmem:[#allocation7 + $0x1c8] sm:$0xff]
    %v269 = vld [vmem:[#allocation7 + $0x1d0] sm:$0xff]
    %v270 = vld [vmem:[#allocation7 + $0x1d8] sm:$0xff]
    %v271 = vld [vmem:[#allocation7 + $0x1e0] sm:$0xff]
    %v272 = vld [vmem:[#allocation7 + $0x1e8] sm:$0xff]
    %v273 = vld [vmem:[#allocation7 + $0x1f0] sm:$0xff]
    %v274 = vld [vmem:[#allocation7 + $0x1f8] sm:$0xff]
    %v275 = vld [vmem:[%s4] sm:$0x3]
    %v277 = vlaneseq
    %v278 = vshrl.u32 %v277, 7
    %v279 = vsub.s32 0, %v278
    %v280 = vrot.slane %v275, %v279
    %v281 = vlaneseq
    %v282 = vshrl.u32 %v281, 7
    %v283 = vsub.s32 1, %v282
    %v284 = vrot.slane %v275, %v283
    %287 = vmatprep.subr.mxu0 %v242
    %288 = vmatpush1.msra.mxu0 %v241
    %289 = vmatprep.subr.mxu0 %v240
    %290 = vmatpush1.msra.mxu0 %v239
    %291 = vmatprep.subr.mxu0 %v238
    %292 = vmatpush1.msra.mxu0 %v237
    %293 = vmatprep.subr.mxu0 %v236
    %294 = vmatpush1.msra.mxu0 %v235
    %295 = vmatprep.subr.mxu0 %v234
    %296 = vmatpush1.msra.mxu0 %v233
    %297 = vmatprep.subr.mxu0 %v232
    %298 = vmatpush1.msra.mxu0 %v231
    %299 = vmatprep.subr.mxu0 %v230
    %300 = vmatpush1.msra.mxu0 %v229
    %301 = vmatprep.subr.mxu0 %v228
    %302 = vmatpush1.msra.mxu0 %v227
    %303 = vmatprep.subr.mxu0 %v226
    %304 = vmatpush1.msra.mxu0 %v225
    %305 = vmatprep.subr.mxu0 %v224
    %306 = vmatpush1.msra.mxu0 %v223
    %307 = vmatprep.subr.mxu0 %v222
    %308 = vmatpush1.msra.mxu0 %v221
    %309 = vmatprep.subr.mxu0 %v220
    %310 = vmatpush1.msra.mxu0 %v219
    %311 = vmatprep.subr.mxu0 %v218
    %312 = vmatpush1.msra.mxu0 %v217
    %313 = vmatprep.subr.mxu0 %v216
    %314 = vmatpush1.msra.mxu0 %v215
    %315 = vmatprep.subr.mxu0 %v214
    %316 = vmatpush1.msra.mxu0 %v213
    %317 = vmatprep.subr.mxu0 %v212
    %318 = vmatpush1.msra.mxu0 %v211
    %319 = vmatprep.subr.mxu0 %v274
    %320 = vmatpush2.msra.mxu0 %v273
    %321 = vmatprep.subr.mxu0 %v272
    %322 = vmatpush2.msra.mxu0 %v271
    %323 = vmatprep.subr.mxu0 %v270
    %324 = vmatpush2.msra.mxu0 %v269
    %325 = vmatprep.subr.mxu0 %v268
    %326 = vmatpush2.msra.mxu0 %v267
    %327 = vmatprep.subr.mxu0 %v266
    %328 = vmatpush2.msra.mxu0 %v265
    %329 = vmatprep.subr.mxu0 %v264
    %330 = vmatpush2.msra.mxu0 %v263
    %331 = vmatprep.subr.mxu0 %v262
    %332 = vmatpush2.msra.mxu0 %v261
    %333 = vmatprep.subr.mxu0 %v260
    %334 = vmatpush2.msra.mxu0 %v259
    %335 = vmatprep.subr.mxu0 %v258
    %336 = vmatpush2.msra.mxu0 %v257
    %337 = vmatprep.subr.mxu0 %v256
    %338 = vmatpush2.msra.mxu0 %v255
    %339 = vmatprep.subr.mxu0 %v254
    %340 = vmatpush2.msra.mxu0 %v253
    %341 = vmatprep.subr.mxu0 %v252
    %342 = vmatpush2.msra.mxu0 %v251
    %343 = vmatprep.subr.mxu0 %v250
    %344 = vmatpush2.msra.mxu0 %v249
    %345 = vmatprep.subr.mxu0 %v248
    %346 = vmatpush2.msra.mxu0 %v247
    %347 = vmatprep.subr.mxu0 %v246
    %348 = vmatpush2.msra.mxu0 %v245
    %349 = vmatprep.subr.mxu0 %v244
    %350 = vmatpush2.msra.mxu0 %v243
    %351 = vmatprep.mubr.f32.mxu0 %v208
    %352 = vmatmul.mubr.f32.gmra.mxu0 %v207
    %v353 = vpop.f32.mrf.mxu0
    %v354 = vadd.f32 %v280, %v353
    %v355 = vpop.f32.mrf.mxu0
    %v356 = vadd.f32 %v284, %v355
    %357 = vmatprep.mubr.f32.mxu0 %v210
    %358 = vmatmul.mubr.f32.gmra.mxu0 %v209
    %v359 = vpop.f32.mrf.mxu0
    %v360 = vadd.f32 %v280, %v359
    %v361 = vpop.f32.mrf.mxu0
    %v362 = vadd.f32 %v284, %v361
    %363 = vdwg.mxu0
    %v364 = vmax.f32 %v354, 0.0
    %v365 = vmax.f32 %v356, 0.0
    %v366 = vmax.f32 %v360, 0.0
    %v367 = vmax.f32 %v362, 0.0
    %v368 = vld [vmem:[#allocation8] sm:$0xff]
    %v369 = vld [vmem:[#allocation8 + $0x8] sm:$0xff]
    %v370 = vld [vmem:[#allocation8 + $0x10] sm:$0xff]
    %v371 = vld [vmem:[#allocation8 + $0x18] sm:$0xff]
    %v372 = vld [vmem:[#allocation8 + $0x20] sm:$0xff]
    %v373 = vld [vmem:[#allocation8 + $0x28] sm:$0xff]
    %v374 = vld [vmem:[#allocation8 + $0x30] sm:$0xff]
    %v375 = vld [vmem:[#allocation8 + $0x38] sm:$0xff]
    %v376 = vld [vmem:[#allocation8 + $0x40] sm:$0xff]
    %v377 = vld [vmem:[#allocation8 + $0x48] sm:$0xff]
    %v378 = vld [vmem:[#allocation8 + $0x50] sm:$0xff]
    %v379 = vld [vmem:[#allocation8 + $0x58] sm:$0xff]
    %v380 = vld [vmem:[#allocation8 + $0x60] sm:$0xff]
    %v381 = vld [vmem:[#allocation8 + $0x68] sm:$0xff]
    %v382 = vld [vmem:[#allocation8 + $0x70] sm:$0xff]
    %v383 = vld [vmem:[#allocation8 + $0x78] sm:$0xff]
    %v384 = vld [vmem:[#allocation8 + $0x80] sm:$0xff]
    %v385 = vld [vmem:[#allocation8 + $0x88] sm:$0xff]
    %v386 = vld [vmem:[#allocation8 + $0x90] sm:$0xff]
    %v387 = vld [vmem:[#allocation8 + $0x98] sm:$0xff]
    %v388 = vld [vmem:[#allocation8 + $0xa0] sm:$0xff]
    %v389 = vld [vmem:[#allocation8 + $0xa8] sm:$0xff]
    %v390 = vld [vmem:[#allocation8 + $0xb0] sm:$0xff]
    %v391 = vld [vmem:[#allocation8 + $0xb8] sm:$0xff]
    %v392 = vld [vmem:[#allocation8 + $0xc0] sm:$0xff]
    %v393 = vld [vmem:[#allocation8 + $0xc8] sm:$0xff]
    %v394 = vld [vmem:[#allocation8 + $0xd0] sm:$0xff]
    %v395 = vld [vmem:[#allocation8 + $0xd8] sm:$0xff]
    %v396 = vld [vmem:[#allocation8 + $0xe0] sm:$0xff]
    %v397 = vld [vmem:[#allocation8 + $0xe8] sm:$0xff]
    %v398 = vld [vmem:[#allocation8 + $0xf0] sm:$0xff]
    %v399 = vld [vmem:[#allocation8 + $0xf8] sm:$0xff]
    %v400 = vld [vmem:[#allocation8 + $0x100] sm:$0xff]
    %v401 = vld [vmem:[#allocation8 + $0x108] sm:$0xff]
    %v402 = vld [vmem:[#allocation8 + $0x110] sm:$0xff]
    %v403 = vld [vmem:[#allocation8 + $0x118] sm:$0xff]
    %v404 = vld [vmem:[#allocation8 + $0x120] sm:$0xff]
    %v405 = vld [vmem:[#allocation8 + $0x128] sm:$0xff]
    %v406 = vld [vmem:[#allocation8 + $0x130] sm:$0xff]
    %v407 = vld [vmem:[#allocation8 + $0x138] sm:$0xff]
    %v408 = vld [vmem:[#allocation8 + $0x140] sm:$0xff]
    %v409 = vld [vmem:[#allocation8 + $0x148] sm:$0xff]
    %v410 = vld [vmem:[#allocation8 + $0x150] sm:$0xff]
    %v411 = vld [vmem:[#allocation8 + $0x158] sm:$0xff]
    %v412 = vld [vmem:[#allocation8 + $0x160] sm:$0xff]
    %v413 = vld [vmem:[#allocation8 + $0x168] sm:$0xff]
    %v414 = vld [vmem:[#allocation8 + $0x170] sm:$0xff]
    %v415 = vld [vmem:[#allocation8 + $0x178] sm:$0xff]
    %v416 = vld [vmem:[#allocation8 + $0x180] sm:$0xff]
    %v417 = vld [vmem:[#allocation8 + $0x188] sm:$0xff]
    %v418 = vld [vmem:[#allocation8 + $0x190] sm:$0xff]
    %v419 = vld [vmem:[#allocation8 + $0x198] sm:$0xff]
    %v420 = vld [vmem:[#allocation8 + $0x1a0] sm:$0xff]
    %v421 = vld [vmem:[#allocation8 + $0x1a8] sm:$0xff]
    %v422 = vld [vmem:[#allocation8 + $0x1b0] sm:$0xff]
    %v423 = vld [vmem:[#allocation8 + $0x1b8] sm:$0xff]
    %v424 = vld [vmem:[#allocation8 + $0x1c0] sm:$0xff]
    %v425 = vld [vmem:[#allocation8 + $0x1c8] sm:$0xff]
    %v426 = vld [vmem:[#allocation8 + $0x1d0] sm:$0xff]
    %v427 = vld [vmem:[#allocation8 + $0x1d8] sm:$0xff]
    %v428 = vld [vmem:[#allocation8 + $0x1e0] sm:$0xff]
    %v429 = vld [vmem:[#allocation8 + $0x1e8] sm:$0xff]
    %v430 = vld [vmem:[#allocation8 + $0x1f0] sm:$0xff]
    %v431 = vld [vmem:[#allocation8 + $0x1f8] sm:$0xff]
    %v432 = vld [vmem:[%s6] sm:$0x3]
    %v434 = vlaneseq
    %v435 = vshrl.u32 %v434, 7
    %v436 = vsub.s32 0, %v435
    %v437 = vrot.slane %v432, %v436
    %v438 = vlaneseq
    %v439 = vshrl.u32 %v438, 7
    %v440 = vsub.s32 1, %v439
    %v441 = vrot.slane %v432, %v440
    %444 = vmatprep.subr.mxu0 %v399
    %445 = vmatpush1.msra.mxu0 %v398
    %446 = vmatprep.subr.mxu0 %v397
    %447 = vmatpush1.msra.mxu0 %v396
    %448 = vmatprep.subr.mxu0 %v395
    %449 = vmatpush1.msra.mxu0 %v394
    %450 = vmatprep.subr.mxu0 %v393
    %451 = vmatpush1.msra.mxu0 %v392
    %452 = vmatprep.subr.mxu0 %v391
    %453 = vmatpush1.msra.mxu0 %v390
    %454 = vmatprep.subr.mxu0 %v389
    %455 = vmatpush1.msra.mxu0 %v388
    %456 = vmatprep.subr.mxu0 %v387
    %457 = vmatpush1.msra.mxu0 %v386
    %458 = vmatprep.subr.mxu0 %v385
    %459 = vmatpush1.msra.mxu0 %v384
    %460 = vmatprep.subr.mxu0 %v383
    %461 = vmatpush1.msra.mxu0 %v382
    %462 = vmatprep.subr.mxu0 %v381
    %463 = vmatpush1.msra.mxu0 %v380
    %464 = vmatprep.subr.mxu0 %v379
    %465 = vmatpush1.msra.mxu0 %v378
    %466 = vmatprep.subr.mxu0 %v377
    %467 = vmatpush1.msra.mxu0 %v376
    %468 = vmatprep.subr.mxu0 %v375
    %469 = vmatpush1.msra.mxu0 %v374
    %470 = vmatprep.subr.mxu0 %v373
    %471 = vmatpush1.msra.mxu0 %v372
    %472 = vmatprep.subr.mxu0 %v371
    %473 = vmatpush1.msra.mxu0 %v370
    %474 = vmatprep.subr.mxu0 %v369
    %475 = vmatpush1.msra.mxu0 %v368
    %476 = vmatprep.subr.mxu0 %v431
    %477 = vmatpush2.msra.mxu0 %v430
    %478 = vmatprep.subr.mxu0 %v429
    %479 = vmatpush2.msra.mxu0 %v428
    %480 = vmatprep.subr.mxu0 %v427
    %481 = vmatpush2.msra.mxu0 %v426
    %482 = vmatprep.subr.mxu0 %v425
    %483 = vmatpush2.msra.mxu0 %v424
    %484 = vmatprep.subr.mxu0 %v423
    %485 = vmatpush2.msra.mxu0 %v422
    %486 = vmatprep.subr.mxu0 %v421
    %487 = vmatpush2.msra.mxu0 %v420
    %488 = vmatprep.subr.mxu0 %v419
    %489 = vmatpush2.msra.mxu0 %v418
    %490 = vmatprep.subr.mxu0 %v417
    %491 = vmatpush2.msra.mxu0 %v416
    %492 = vmatprep.subr.mxu0 %v415
    %493 = vmatpush2.msra.mxu0 %v414
    %494 = vmatprep.subr.mxu0 %v413
    %495 = vmatpush2.msra.mxu0 %v412
    %496 = vmatprep.subr.mxu0 %v411
    %497 = vmatpush2.msra.mxu0 %v410
    %498 = vmatprep.subr.mxu0 %v409
    %499 = vmatpush2.msra.mxu0 %v408
    %500 = vmatprep.subr.mxu0 %v407
    %501 = vmatpush2.msra.mxu0 %v406
    %502 = vmatprep.subr.mxu0 %v405
    %503 = vmatpush2.msra.mxu0 %v404
    %504 = vmatprep.subr.mxu0 %v403
    %505 = vmatpush2.msra.mxu0 %v402
    %506 = vmatprep.subr.mxu0 %v401
    %507 = vmatpush2.msra.mxu0 %v400
    %508 = vmatprep.mubr.f32.mxu0 %v365
    %509 = vmatmul.mubr.f32.gmra.mxu0 %v364
    %v510 = vpop.f32.mrf.mxu0
    %v511 = vadd.f32 %v437, %v510
    %v512 = vpop.f32.mrf.mxu0
    %v513 = vadd.f32 %v441, %v512
    %514 = vmatprep.mubr.f32.mxu0 %v367
    %515 = vmatmul.mubr.f32.gmra.mxu0 %v366
    %v516 = vpop.f32.mrf.mxu0
    %v517 = vadd.f32 %v437, %v516
    %v518 = vpop.f32.mrf.mxu0
    %v519 = vadd.f32 %v441, %v518
    %520 = vdwg.mxu0
    %v521 = vmax.f32 %v511, 0.0
    %v522 = vmax.f32 %v513, 0.0
    %v523 = vmax.f32 %v517, 0.0
    %v524 = vmax.f32 %v519, 0.0
    %v525 = vld [vmem:[#allocation10] sm:$0xff]
    %v526 = vld [vmem:[#allocation10 + $0x8] sm:$0xff]
    %v527 = vld [vmem:[#allocation10 + $0x10] sm:$0xff]
    %v528 = vld [vmem:[#allocation10 + $0x18] sm:$0xff]
    %v529 = vld [vmem:[#allocation10 + $0x20] sm:$0xff]
    %v530 = vld [vmem:[#allocation10 + $0x28] sm:$0xff]
    %v531 = vld [vmem:[#allocation10 + $0x30] sm:$0xff]
    %v532 = vld [vmem:[#allocation10 + $0x38] sm:$0xff]
    %v533 = vld [vmem:[#allocation10 + $0x40] sm:$0xff]
    %v534 = vld [vmem:[#allocation10 + $0x48] sm:$0xff]
    %v535 = vld [vmem:[#allocation10 + $0x50] sm:$0xff]
    %v536 = vld [vmem:[#allocation10 + $0x58] sm:$0xff]
    %v537 = vld [vmem:[#allocation10 + $0x60] sm:$0xff]
    %v538 = vld [vmem:[#allocation10 + $0x68] sm:$0xff]
    %v539 = vld [vmem:[#allocation10 + $0x70] sm:$0xff]
    %v540 = vld [vmem:[#allocation10 + $0x78] sm:$0xff]
    %v541 = vld [vmem:[#allocation10 + $0x80] sm:$0xff]
    %v542 = vld [vmem:[#allocation10 + $0x88] sm:$0xff]
    %v543 = vld [vmem:[#allocation10 + $0x90] sm:$0xff]
    %v544 = vld [vmem:[#allocation10 + $0x98] sm:$0xff]
    %v545 = vld [vmem:[#allocation10 + $0xa0] sm:$0xff]
    %v546 = vld [vmem:[#allocation10 + $0xa8] sm:$0xff]
    %v547 = vld [vmem:[#allocation10 + $0xb0] sm:$0xff]
    %v548 = vld [vmem:[#allocation10 + $0xb8] sm:$0xff]
    %v549 = vld [vmem:[#allocation10 + $0xc0] sm:$0xff]
    %v550 = vld [vmem:[#allocation10 + $0xc8] sm:$0xff]
    %v551 = vld [vmem:[#allocation10 + $0xd0] sm:$0xff]
    %v552 = vld [vmem:[#allocation10 + $0xd8] sm:$0xff]
    %v553 = vld [vmem:[#allocation10 + $0xe0] sm:$0xff]
    %v554 = vld [vmem:[#allocation10 + $0xe8] sm:$0xff]
    %v555 = vld [vmem:[#allocation10 + $0xf0] sm:$0xff]
    %v556 = vld [vmem:[#allocation10 + $0xf8] sm:$0xff]
    %v557 = vld [vmem:[%s8] sm:$0x1]
    %v559 = vlaneseq
    %v560 = vshrl.u32 %v559, 7
    %v561 = vsub.s32 0, %v560
    %v562 = vrot.slane %v557, %v561
    %564 = vmatprep.subr.mxu0 0.0
    %565 = vmatpush1.msra.mxu0 %v540
    %566 = vmatprep.subr.mxu0 0.0
    %567 = vmatpush1.msra.mxu0 %v539
    %568 = vmatprep.subr.mxu0 0.0
    %569 = vmatpush1.msra.mxu0 %v538
    %570 = vmatprep.subr.mxu0 0.0
    %571 = vmatpush1.msra.mxu0 %v537
    %572 = vmatprep.subr.mxu0 0.0
    %573 = vmatpush1.msra.mxu0 %v536
    %574 = vmatprep.subr.mxu0 0.0
    %575 = vmatpush1.msra.mxu0 %v535
    %576 = vmatprep.subr.mxu0 0.0
    %577 = vmatpush1.msra.mxu0 %v534
    %578 = vmatprep.subr.mxu0 0.0
    %579 = vmatpush1.msra.mxu0 %v533
    %580 = vmatprep.subr.mxu0 0.0
    %581 = vmatpush1.msra.mxu0 %v532
    %582 = vmatprep.subr.mxu0 0.0
    %583 = vmatpush1.msra.mxu0 %v531
    %584 = vmatprep.subr.mxu0 0.0
    %585 = vmatpush1.msra.mxu0 %v530
    %586 = vmatprep.subr.mxu0 0.0
    %587 = vmatpush1.msra.mxu0 %v529
    %588 = vmatprep.subr.mxu0 0.0
    %589 = vmatpush1.msra.mxu0 %v528
    %590 = vmatprep.subr.mxu0 0.0
    %591 = vmatpush1.msra.mxu0 %v527
    %592 = vmatprep.subr.mxu0 0.0
    %593 = vmatpush1.msra.mxu0 %v526
    %594 = vmatprep.subr.mxu0 0.0
    %595 = vmatpush1.msra.mxu0 %v525
    %596 = vmatprep.subr.mxu0 0.0
    %597 = vmatpush2.msra.mxu0 %v556
    %598 = vmatprep.subr.mxu0 0.0
    %599 = vmatpush2.msra.mxu0 %v555
    %600 = vmatprep.subr.mxu0 0.0
    %601 = vmatpush2.msra.mxu0 %v554
    %602 = vmatprep.subr.mxu0 0.0
    %603 = vmatpush2.msra.mxu0 %v553
    %604 = vmatprep.subr.mxu0 0.0
    %605 = vmatpush2.msra.mxu0 %v552
    %606 = vmatprep.subr.mxu0 0.0
    %607 = vmatpush2.msra.mxu0 %v551
    %608 = vmatprep.subr.mxu0 0.0
    %609 = vmatpush2.msra.mxu0 %v550
    %610 = vmatprep.subr.mxu0 0.0
    %611 = vmatpush2.msra.mxu0 %v549
    %612 = vmatprep.subr.mxu0 0.0
    %613 = vmatpush2.msra.mxu0 %v548
    %614 = vmatprep.subr.mxu0 0.0
    %615 = vmatpush2.msra.mxu0 %v547
    %616 = vmatprep.subr.mxu0 0.0
    %617 = vmatpush2.msra.mxu0 %v546
    %618 = vmatprep.subr.mxu0 0.0
    %619 = vmatpush2.msra.mxu0 %v545
    %620 = vmatprep.subr.mxu0 0.0
    %621 = vmatpush2.msra.mxu0 %v544
    %622 = vmatprep.subr.mxu0 0.0
    %623 = vmatpush2.msra.mxu0 %v543
    %624 = vmatprep.subr.mxu0 0.0
    %625 = vmatpush2.msra.mxu0 %v542
    %626 = vmatprep.subr.mxu0 0.0
    %627 = vmatpush2.msra.mxu0 %v541
    %628 = vmatprep.mubr.f32.mxu0 %v522
    %629 = vmatmul.mubr.f32.gmra.mxu0 %v521
    %v630 = vpop.f32.mrf.mxu0
    %v631 = vadd.f32 %v562, %v630
    %v632 = vpop.f32.mrf.mxu0
    %633 = vmatprep.mubr.f32.mxu0 %v524
    %634 = vmatmul.mubr.f32.gmra.mxu0 %v523
    %v635 = vpop.f32.mrf.mxu0
    %v636 = vadd.f32 %v562, %v635
    %v637 = vpop.f32.mrf.mxu0
    %638 = vdwg.mxu0
    %v639 = vsub.f32 0.0, %v631
    %v640 = vsub.f32 0.0, %v636
    %v641 = vmul.f32 %v639, 1.442695
    %v642 = vpow.pop %v641
    %v643 = vmul.f32 %v640, 1.442695
    %v644 = vpow.pop %v643
    %v645 = vadd.f32 %v642, 1.0
    %v646 = vadd.f32 %v644, 1.0
    %v647 = vrcp.pop %v645
    %v648 = vrcp.pop %v646
    %649 = vst [vmem:[#allocation11] sm:$0xff] %v647
    %650 = vst [vmem:[#allocation11 + $0x8] sm:$0xff] %v648
    // Predicated region
    $region58: #{tpu_custom_call.1} parent=1 // pred_check
      _
    $region59: #{tpu_custom_call.1} parent=1 // pred_check_branch
      %652 = sbr.rel (0) target = $region61
    $region60: #{tpu_custom_call.1} parent=1 // pred_region
      %s654 = ssub.s32 256, 256
      %655 = vsyncadd [#allocation4], %s654
      %s656 = sshll.u32 [#allocation11], 4
      %s657 = int_to_ptr.vmem [resolvable:$true] %s656
      %662 = dma.vmem_to_hbm [thread:$0]  %s657, 256, %s9, [#allocation4], 128, 128, 8
    $region61: #{tpu_custom_call.1} parent=1 // pred_fallthru
      _
    // Predicated region
    $region62: #{tpu_custom_call.1} parent=1 // pred_check
      _
    $region63: #{tpu_custom_call.1} parent=1 // pred_check_branch
      %664 = sbr.rel (0) target = $region65
    $region64: #{tpu_custom_call.1} parent=1 // pred_region
      %665 = dma.done [#allocation4], 256
    $region65: #{tpu_custom_call.1} parent=1 // pred_fallthru
      _
    %666 = vsyncpa [#allocation3], 1
    %667 = vsyncpa [#allocation6], 1
    %668 = vsyncpa [#allocation9], 1
    %669 = vsyncpa [#allocation4], 1

</llo_original>
